<compile_context>
chip_gen: v7x
topology: tpu7x:2x2x1
jax: 0.10.0
libtpu: 0.0.40
codegen_flags: <defaults>
</compile_context>

<pallas_src>
import functools

import jax
import jax.numpy as jnp
from jax.experimental import pallas as pl
from jax.experimental.pallas import tpu as pltpu


def _gce_kernel(logits_ref, targets_ref, loss_ref, *, q, exp_dtype, mxu_reduce):
    # logits_ref: (bn, C) native dtype, targets_ref: (bn, 1) int32, loss_ref: (bn, 1) f32
    z = logits_ref[...]                                   # (bn, C) native dtype
    t = targets_ref[...]                                  # (bn, 1) int32
    C = z.shape[-1]

    # Numerically-stable logsumexp: max + centering in the native dtype; the single
    # f32 (or opt-in bf16) cast is fused into the subtract that feeds the EUP exp.
    m = jnp.max(z, axis=-1, keepdims=True)                # (bn, 1) native
    ez = jnp.exp((z - m).astype(exp_dtype))               # (bn, C)

    # Target gather via lane compare against a hoisted (1, C) iota -- no (bn, C) int32
    # temporary -- and masked select in the input dtype.
    col = jax.lax.broadcasted_iota(jnp.int32, (1, C), 1)  # (1, C) column ids
    onehot = col == t                                     # broadcast -> (bn, C)
    zt_masked = jnp.where(onehot, z, 0)                   # (bn, C) native dtype

    if mxu_reduce:
        # Experimental v7x lever: the MXU is otherwise idle, so route the cross-lane
        # reductions through it to free VPU/XLU slots.  Off by default.
        ones = jnp.ones((C, 1), jnp.float32)
        s = jnp.dot(ez.astype(jnp.float32), ones,
                    preferred_element_type=jnp.float32)                   # (bn, 1)
        z_t = jnp.dot(zt_masked.astype(jnp.float32), ones,
                      preferred_element_type=jnp.float32)                 # (bn, 1)
    else:
        s = jnp.sum(ez.astype(jnp.float32), axis=-1, keepdims=True)       # (bn, 1)
        z_t = jnp.sum(zt_masked, axis=-1, keepdims=True).astype(jnp.float32)

    lse = m.astype(jnp.float32) + jnp.log(s)              # (bn, 1)
    d = z_t - lse                                         # log p_t  (<= 0)
    ce = -d                                               # CE with reduction='none'
    weight = jnp.exp(q * d) * q                           # = p_t**q * q, one exp/row
    loss_ref[...] = (ce * weight).astype(loss_ref.dtype)


def _round_up(x, m):
    return ((x + m - 1) // m) * m


def _round_down(x, m):
    return (x // m) * m


def generalized_ce_loss(logits, targets, q=0.7, block_n=None,
                        mxu_reduce=False, exp_in_bf16=False):
    """logits: [N, C] float (f32/bf16), targets: [N] int. Returns per-sample loss [N] f32."""
    N, C = logits.shape
    in_bytes = jnp.dtype(logits.dtype).itemsize
    # sublane packing multiple of the input dtype (f32: 8, bf16: 16, int8/fp8: 32)
    row_align = {4: 8, 2: 16, 1: 32}.get(in_bytes, 8)

    # Generation-aware VMEM budget (v7x: 64 MiB physical, v5e/v6e: 128 MiB).
    try:
        vmem_cap = int(pltpu.get_tpu_info().vmem_capacity_bytes)
    except Exception:
        vmem_cap = 64 * 1024 * 1024  # conservative (v7x-sized) fallback

    n_rows = _round_up(N, row_align)

    if block_n is None:
        budget = vmem_cap // 3
        # 2x native bytes for the double-buffered DMA tile plus ~16 B/elem of f32
        # temporaries (exp result, one-hot/select) that may materialize in VMEM/vregs.
        per_row = C * (2 * in_bytes + 16)
        block_n = max(row_align, _round_down(budget // max(per_row, 1), row_align))
    block_n = max(row_align, _round_down(block_n, row_align))
    block_n = min(block_n, n_rows)

    # Keep >= 4 grid steps when the batch allows: the single "parallel" axis is what
    # shards across v7x's two TensorCores, and multiple steps let the input
    # double/triple buffer actually overlap DMA with compute.
    min_steps = 4
    if n_rows >= min_steps * row_align:
        block_n = min(block_n, max(row_align, _round_down(n_rows // min_steps, row_align)))

    grid_n = pl.cdiv(N, block_n)   # partial last block handled by Pallas (no jnp.pad)

    targets2d = targets.astype(jnp.int32).reshape(N, 1)

    # Deeper buffering only pays off for small tiles (short compute per step exposes
    # DMA issue latency); for large tiles keep the default 2 buffers to save VMEM.
    tile_bytes = block_n * C * in_bytes
    n_bufs = 3 if (tile_bytes <= (1 << 20) and grid_n >= 3) else 2
    if n_bufs == 3:
        logits_spec = pl.BlockSpec((block_n, C), lambda i: (i, 0),
                                   pipeline_mode=pl.Buffered(3))
    else:
        logits_spec = pl.BlockSpec((block_n, C), lambda i: (i, 0))

    # Scoped-VMEM: pipelined logits tiles + in-kernel f32 temporaries + slack,
    # never exceeding ~90% of physical VMEM on this generation.
    vmem_est = (n_bufs * tile_bytes
                + block_n * C * 16
                + 8 * block_n * 4
                + (2 << 20))
    vmem_limit = int(min(max(vmem_est, 32 * 1024 * 1024), int(vmem_cap * 0.9)))

    cost = pl.CostEstimate(
        flops=6 * N * C,
        transcendentals=N * C + 2 * N,
        bytes_accessed=N * C * in_bytes + 2 * N * 4,
    )

    out = pl.pallas_call(
        functools.partial(
            _gce_kernel, q=q, mxu_reduce=mxu_reduce,
            exp_dtype=jnp.bfloat16 if exp_in_bf16 else jnp.float32),
        out_shape=jax.ShapeDtypeStruct((N, 1), jnp.float32),
        grid_spec=pltpu.PrefetchScalarGridSpec(
            num_scalar_prefetch=0,
            grid=(grid_n,),
            in_specs=[
                logits_spec,                                   # logits tile
                pl.BlockSpec((block_n, 1), lambda i: (i, 0)),  # targets tile
            ],
            out_specs=pl.BlockSpec((block_n, 1), lambda i: (i, 0)),
        ),
        compiler_params=pltpu.CompilerParams(
            dimension_semantics=("parallel",),
            vmem_limit_bytes=vmem_limit,
        ),
        cost_estimate=cost,
    )(logits, targets2d)
    return out[:, 0]


def _ref_gce(logits, targets, q):
    logp = jax.nn.log_softmax(logits, axis=1)
    p = jnp.exp(logp)
    yg = jnp.take_along_axis(p, targets[:, None], axis=1)[:, 0]
    ce = -jnp.take_along_axis(logp, targets[:, None], axis=1)[:, 0]
    return ce * (yg ** q) * q


if __name__ == "__main__":
    key = jax.random.PRNGKey(0)
    k1, k2 = jax.random.split(key)

    # Small test consistent with the module: batch=16 samples, 32 classes.
    N, C = 16, 32
    logits = jax.random.normal(k1, (N, C), dtype=jnp.float32)
    targets = jax.random.randint(k2, (N,), 0, C, dtype=jnp.int32)

    loss = generalized_ce_loss(logits, targets, q=0.7)
    jax.block_until_ready(loss)

    ref = _ref_gce(logits, targets, 0.7)
    assert loss.shape == (N,)
    assert jnp.allclose(loss, ref, atol=1e-5, rtol=1e-5)

    # Second check: batch not a multiple of the tile -> exercises the no-pad partial
    # last block, multi-step grid and the Buffered(3) small-tile path.
    N2, C2 = 300, 16
    k3, k4 = jax.random.split(k1)
    logits2 = jax.random.normal(k3, (N2, C2), dtype=jnp.float32)
    targets2 = jax.random.randint(k4, (N2,), 0, C2, dtype=jnp.int32)

    loss2 = generalized_ce_loss(logits2, targets2, q=0.7)
    jax.block_until_ready(loss2)

    ref2 = _ref_gce(logits2, targets2, 0.7)
    assert loss2.shape == (N2,)
    assert bool(jnp.all(jnp.isfinite(loss2)))
    assert jnp.allclose(loss2, ref2, atol=1e-5, rtol=1e-5)

    print("KERNEL_OK")
</pallas_src>

<mosaic_0001>
module attributes {stable_mosaic.version = 11 : i64} {
  func.func @_gce_kernel(%arg0: i32, %arg1: memref<16x32xf32, #tpu.memory_space<vmem>>, %arg2: memref<16x1xi32, #tpu.memory_space<vmem>>, %arg3: memref<16x1xf32, #tpu.memory_space<vmem>>) attributes {dimension_semantics = [#tpu.dimension_semantics<parallel>], iteration_bounds = array<i64: 1>, scalar_prefetch = 0 : i64, scratch_operands = 0 : i64, tpu.core_type = #tpu.core_type<tc>, window_params = [{transform_indices = @transform_0, window_bounds = array<i64: 16, 32>}, {transform_indices = @transform_1, window_bounds = array<i64: 16, 1>}, {transform_indices = @transform_2, window_bounds = array<i64: 16, 1>}]} {
    %c0 = arith.constant 0 : index
    %c0_0 = arith.constant 0 : index
    %0 = vector.load %arg1[%c0, %c0_0] : memref<16x32xf32, #tpu.memory_space<vmem>>, vector<16x32xf32>
    %c0_1 = arith.constant 0 : index
    %c0_2 = arith.constant 0 : index
    %1 = vector.load %arg2[%c0_1, %c0_2] : memref<16x1xi32, #tpu.memory_space<vmem>>, vector<16x1xi32>
    %cst = arith.constant dense<0xFF800000> : vector<16xf32>
    %2 = vector.multi_reduction <maximumf>, %0, %cst [1] : vector<16x32xf32> to vector<16xf32>
    %3 = vector.shape_cast %2 : vector<16xf32> to vector<16x1xf32>
    %4 = vector.broadcast %3 : vector<16x1xf32> to vector<16x32xf32>
    %5 = arith.subf %0, %4 : vector<16x32xf32>
    %6 = math.exp %5 : vector<16x32xf32>
    %7 = tpu.iota {dimensions = array<i32: 1>} : vector<1x32xi32>
    %8 = vector.broadcast %7 : vector<1x32xi32> to vector<16x32xi32>
    %9 = vector.broadcast %1 : vector<16x1xi32> to vector<16x32xi32>
    %10 = arith.cmpi eq, %8, %9 : vector<16x32xi32>
    %c0_i32 = arith.constant 0 : i32
    %11 = arith.sitofp %c0_i32 : i32 to f32
    %12 = vector.broadcast %11 : f32 to vector<16x32xf32>
    %13 = arith.select %10, %0, %12 : vector<16x32xi1>, vector<16x32xf32>
    %cst_3 = arith.constant dense<0.000000e+00> : vector<16xf32>
    %14 = vector.multi_reduction <add>, %6, %cst_3 [1] : vector<16x32xf32> to vector<16xf32>
    %15 = vector.shape_cast %14 : vector<16xf32> to vector<16x1xf32>
    %cst_4 = arith.constant dense<0.000000e+00> : vector<16xf32>
    %16 = vector.multi_reduction <add>, %13, %cst_4 [1] : vector<16x32xf32> to vector<16xf32>
    %17 = vector.shape_cast %16 : vector<16xf32> to vector<16x1xf32>
    %18 = math.log %15 : vector<16x1xf32>
    %19 = arith.addf %3, %18 : vector<16x1xf32>
    %20 = arith.subf %17, %19 : vector<16x1xf32>
    %cst_5 = arith.constant 0.000000e+00 : f32
    %21 = vector.broadcast %cst_5 : f32 to vector<16x1xf32>
    %22 = arith.subf %21, %20 : vector<16x1xf32>
    %cst_6 = arith.constant 0.699999988 : f32
    %23 = vector.broadcast %cst_6 : f32 to vector<16x1xf32>
    %24 = arith.mulf %23, %20 : vector<16x1xf32>
    %25 = math.exp %24 : vector<16x1xf32>
    %cst_7 = arith.constant 0.699999988 : f32
    %26 = vector.broadcast %cst_7 : f32 to vector<16x1xf32>
    %27 = arith.mulf %25, %26 : vector<16x1xf32>
    %28 = arith.mulf %22, %27 : vector<16x1xf32>
    %c0_8 = arith.constant 0 : index
    %c0_9 = arith.constant 0 : index
    %29 = vector.load %arg3[%c0_8, %c0_9] : memref<16x1xf32, #tpu.memory_space<vmem>>, vector<16x1xf32>
    tpu.vector_store %arg3[%c0_8, %c0_9], %28 {strides = array<i32>} : memref<16x1xf32, #tpu.memory_space<vmem>>, vector<16x1xf32>,
    return
  }
  func.func @transform_0(%arg0: i32) -> (i32, i32) {
    %c0_i32 = arith.constant 0 : i32
    %c0_i32_0 = arith.constant 0 : i32
    return %arg0, %c0_i32 : i32, i32
  }
  func.func @transform_1(%arg0: i32) -> (i32, i32) {
    %c0_i32 = arith.constant 0 : i32
    %c0_i32_0 = arith.constant 0 : i32
    return %arg0, %c0_i32 : i32, i32
  }
  func.func @transform_2(%arg0: i32) -> (i32, i32) {
    %c0_i32 = arith.constant 0 : i32
    %c0_i32_0 = arith.constant 0 : i32
    return %arg0, %c0_i32 : i32, i32
  }
}

</mosaic_0001>

<llo_original>
// kernel: tpu_custom_call.1
$region0: #{tpu_custom_call.1}
  #allocation0 [shape = 'u32[]', space=smem, size = 0x4, offset = 0x4, fixed_abs, tag = 'smem constant byte address 0x4 - core index']
  #allocation1 [shape = 'u32[144,128]{1,0:T(1,128)}', space=vmem, size = 0x12000, scoped, tag = 'internal scratch']
  %s0 = inlined_call_operand.vmem [shape: f32[16,32], index: 0, kind: input, shape index: {}]
  %s1 = inlined_call_operand.vmem [shape: s32[16,1], index: 1, kind: input, shape index: {}]
  %s2 = inlined_call_operand.vmem [shape: f32[16,1], index: 2, kind: output, shape index: {}]
  %s3 = sld [smem:[#allocation0]]
  $region18: #{tpu_custom_call.1} parent=0
    _
  %s5 = ssub.s32 1, %s3
  %s6 = scalar_select 0, %s5, %s3
  // Predicated region
  $region2: #{tpu_custom_call.1} parent=0 // pred_check
    _
  $region3: #{tpu_custom_call.1} parent=0 // pred_check_branch
    %8 = sbr.rel (0) target = $region5
  $region4: #{tpu_custom_call.1} parent=0 // pred_region
    _
  $region5: #{tpu_custom_call.1} parent=0 // pred_fallthru
    _
  // Predicated region
  $region6: #{tpu_custom_call.1} parent=0 // pred_check
    _
  $region7: #{tpu_custom_call.1} parent=0 // pred_check_branch
    %10 = sbr.rel (0) target = $region9
  $region8: #{tpu_custom_call.1} parent=0 // pred_region
    _
  $region9: #{tpu_custom_call.1} parent=0 // pred_fallthru
    _
  %v11 = vld [vmem:[%s0] sm:$0xff]
  %v12 = vld [vmem:[%s0 + $0x8] sm:$0xff]
  %v13 = vld [vmem:[%s1] sm:$0xff]
  %v14 = vld [vmem:[%s1 + $0x8] sm:$0xff]
  %vm15 = vcmask 261120
  %v16 = vsel %vm15, %v11, -inf
  %17 = vmax.xlane.f32.xlu0 %v16
  %v18 = vpop.xlane.xlu0 %17
  %v19 = vsel %vm15, %v12, -inf
  %20 = vmax.xlane.f32.xlu0 %v19
  %v21 = vpop.xlane.xlu0 %20
  %v22 = vsub.f32 %v11, %v18
  %v23 = vsub.f32 %v12, %v21
  %v24 = vmul.f32 %v22, 1.442695
  %v25 = vpow.pop %v24
  %v26 = vmul.f32 %v23, 1.442695
  %v27 = vpow.pop %v26
  %v28 = vlaneseq
  %v29 = vand.u32 %v28, 127
  %30 = vset.pattern.permute.xlu0 0
  %31 = vperm.xlu0 %30, %v13
  %v32 = vpop.permute.xlu0 %31
  %33 = vset.pattern.permute.xlu0 0
  %34 = vperm.xlu0 %33, %v14
  %v35 = vpop.permute.xlu0 %34
  %vm36 = vcmp.eq.s32.totalorder %v29, %v32
  %vm37 = vcmp.eq.s32.totalorder %v29, %v35
  %v38 = vsel %vm36, %v11, 0.0
  %v39 = vsel %vm37, %v12, 0.0
  %v40 = vsel %vm15, %v25, 0.0
  %41 = vadd.xlane.f32.xlu0 %v40
  %v42 = vpop.xlane.xlu0 %41
  %v43 = vsel %vm15, %v27, 0.0
  %44 = vadd.xlane.f32.xlu0 %v43
  %v45 = vpop.xlane.xlu0 %44
  %v46 = vsel %vm15, %v38, 0.0
  %47 = vadd.xlane.f32.xlu0 %v46
  %v48 = vpop.xlane.xlu0 %47
  %v49 = vsel %vm15, %v39, 0.0
  %50 = vadd.xlane.f32.xlu0 %v49
  %v51 = vpop.xlane.xlu0 %50
  %v52 = vlog2.pop %v42
  %v53 = vmul.f32 %v52, 0.6931472
  %v54 = vlog2.pop %v45
  %v55 = vmul.f32 %v54, 0.6931472
  %v56 = vadd.f32 %v18, %v53
  %v57 = vadd.f32 %v21, %v55
  %v58 = vsub.f32 %v48, %v56
  %v59 = vsub.f32 %v51, %v57
  %v60 = vsub.f32 0.0, %v58
  %v61 = vsub.f32 0.0, %v59
  %v62 = vmul.f32 %v58, 0.7
  %v63 = vmul.f32 %v59, 0.7
  %v64 = vmul.f32 %v62, 1.442695
  %v65 = vpow.pop %v64
  %v66 = vmul.f32 %v63, 1.442695
  %v67 = vpow.pop %v66
  %v68 = vmul.f32 %v65, 0.7
  %v69 = vmul.f32 %v67, 0.7
  %v70 = vmul.f32 %v60, %v68
  %v71 = vmul.f32 %v61, %v69
  %vm72 = vcmask 7168
  %73 = vst.msk [vmem:[%s2] sm:$0xff] %vm72, %v70
  %74 = vst.msk [vmem:[%s2 + $0x8] sm:$0xff] %vm72, %v71
  // Predicated region
  $region10: #{tpu_custom_call.1} parent=0 // pred_check
    _
  $region11: #{tpu_custom_call.1} parent=0 // pred_check_branch
    %76 = sbr.rel (0) target = $region13
  $region12: #{tpu_custom_call.1} parent=0 // pred_region
    _
  $region13: #{tpu_custom_call.1} parent=0 // pred_fallthru
    _
  // Predicated region
  $region14: #{tpu_custom_call.1} parent=0 // pred_check
    _
  $region15: #{tpu_custom_call.1} parent=0 // pred_check_branch
    %78 = sbr.rel (0) target = $region17
  $region16: #{tpu_custom_call.1} parent=0 // pred_region
    _
  $region17: #{tpu_custom_call.1} parent=0 // pred_fallthru
    _

</llo_original>
